<compile_context>
chip_gen: v7x
topology: tpu7x:2x2x1
jax: 0.10.0
libtpu: 0.0.40
codegen_flags: <defaults>
</compile_context>

<pallas_src>
import jax
import jax.numpy as jnp
from jax.experimental import pallas as pl
from jax.experimental.pallas import tpu as pltpu


_NEG_BIG = -1e30  # finite stand-in for -inf on padded vocab columns


# ---------------------------------------------------------------------------
# Kernels
# ---------------------------------------------------------------------------
def _linear_logsoftmax_kernel(x_ref, w_ref, b_ref, o_ref):
    # x_ref : (TM, D)  row block of the flattened input
    # w_ref : (D,  V)  bf16 transposed weight (resident across the grid)
    # b_ref : (1,  V)  f32 bias (resident)
    # o_ref : (TM, V)  log-softmax output block
    x = x_ref[...].astype(jnp.bfloat16)                      # bf16 MXU operand
    logits = jnp.dot(x, w_ref[...], preferred_element_type=jnp.float32)
    logits = logits + b_ref[...].astype(jnp.float32)

    m = jnp.max(logits, axis=-1, keepdims=True)              # XLU reduce
    shifted = logits - m
    lse = jnp.log(jnp.sum(jnp.exp(shifted), axis=-1, keepdims=True))  # EUP+XLU
    o_ref[...] = (shifted - lse).astype(o_ref.dtype)


def _linear_logsoftmax_vtiled_kernel(x_ref, w_ref, b_ref, o_ref, m_sc, l_sc):
    # Two-pass online log-sum-exp over vocab tiles (grid = (rows, 2, v_tiles)):
    #   pass p=0 : accumulate running row max (m) and running sum-exp (l)
    #   pass p=1 : recompute the logits tile and write logits - (m + log l)
    p = pl.program_id(1)
    v = pl.program_id(2)

    x = x_ref[...].astype(jnp.bfloat16)
    logits = jnp.dot(x, w_ref[...], preferred_element_type=jnp.float32)
    logits = logits + b_ref[...].astype(jnp.float32)         # (TM, TV)

    @pl.when(jnp.logical_and(p == 0, v == 0))
    def _():
        m_sc[...] = jnp.full_like(m_sc, -jnp.inf)
        l_sc[...] = jnp.zeros_like(l_sc)

    @pl.when(p == 0)
    def _():
        m_new = jnp.maximum(m_sc[...], jnp.max(logits, axis=-1, keepdims=True))
        l_sc[...] = (l_sc[...] * jnp.exp(m_sc[...] - m_new)
                     + jnp.sum(jnp.exp(logits - m_new), axis=-1, keepdims=True))
        m_sc[...] = m_new

    @pl.when(p == 1)
    def _():
        lse = m_sc[...] + jnp.log(l_sc[...])
        o_ref[...] = (logits - lse).astype(o_ref.dtype)


# ---------------------------------------------------------------------------
# Tiling / budget helpers
# ---------------------------------------------------------------------------
def _round_up(x: int, m: int) -> int:
    return ((x + m - 1) // m) * m


def _physical_vmem_bytes() -> int:
    try:
        cap = getattr(pltpu.get_tpu_info(), "vmem_capacity_bytes", None)
        if cap:
            return int(cap)
    except Exception:
        pass
    return 64 * 1024 * 1024  # conservative default: v7x per-TensorCore VMEM


def _ensure_two_row_blocks(tm: int, n_rows: int) -> int:
    # Never let one block swallow all rows when there are enough to split,
    # so the "parallel" row axis gives both v7x TensorCores work.
    if n_rows >= 16 and tm >= n_rows:
        tm = _round_up(-(-n_rows // 2), 8)
    return max(8, min(tm, _round_up(n_rows, 8)))


def _select_blocks(n_rows, d_model, v_pad, x_bytes, o_bytes, budget,
                   row_block=None, v_block=None):
    """Pick (row_block, vocab_block, vocab_tiled) from a VMEM budget."""
    w_bytes = 2  # bf16 weight

    def fits(tm, tv):
        fp = (2 * tm * d_model * x_bytes     # double-buffered x blocks
              + 2 * d_model * tv * w_bytes   # double-buffered W^T block
              + 2 * tv * 4                   # bias block
              + 2 * tm * tv * o_bytes        # double-buffered output block
              + 4 * tm * 4)                  # m/l scratch (tiled path)
        return fp <= budget

    row_cands = (row_block,) if row_block else (1024, 512, 256, 128, 64, 32, 16, 8)

    if v_block is None:
        # Preferred: whole padded vocab resident -> single pass, one matmul.
        for tm in row_cands:
            if fits(tm, v_pad):
                return _ensure_two_row_blocks(tm, n_rows), v_pad, False
        v_cands = [c for c in (2048, 1024, 512, 256, 128)
                   if c < v_pad and v_pad % c == 0]
        if not v_cands:
            v_cands = [v_pad]
    else:
        v_cands = [v_block]

    for tm in row_cands:
        for tv in v_cands:
            if fits(tm, tv):
                return _ensure_two_row_blocks(tm, n_rows), tv, tv < v_pad
    tm, tv = row_cands[-1], v_cands[-1]
    return _ensure_two_row_blocks(tm, n_rows), tv, tv < v_pad


# ---------------------------------------------------------------------------
# Parameter prep (one-time) and forward
# ---------------------------------------------------------------------------
def init_linear_params(weight, bias):
    """One-time parameter prep (NOT per forward): transpose to (D, V), cast the
    weight to bf16 for the MXU, and pad V to a multiple of 128 so output stores
    are unmasked lane-dense vst's."""
    vocab, d_model = weight.shape
    v_pad = _round_up(vocab, 128)
    w_t = jnp.transpose(weight).astype(jnp.bfloat16)          # (D, V)
    b = bias.astype(jnp.float32)
    if v_pad != vocab:
        w_t = jnp.pad(w_t, ((0, 0), (0, v_pad - vocab)))
        b = jnp.pad(b, (0, v_pad - vocab), constant_values=_NEG_BIG)
    return w_t, b.reshape(1, v_pad), vocab


def linear_log_softmax(x, params, *, row_block=None, v_block=None,
                       vmem_budget_bytes=None):
    """log_softmax(x @ W^T + b, axis=-1). `params` from init_linear_params."""
    w_t, b2, vocab = params
    d_model, v_pad = w_t.shape
    *lead, d_x = x.shape
    assert d_x == d_model, "x last dim must equal dModel"

    x2 = x.reshape(-1, d_model)                 # fuse batch & seq rows
    n_rows = x2.shape[0]

    cap = _physical_vmem_bytes()
    budget = vmem_budget_bytes if vmem_budget_bytes is not None else int(cap * 0.45)
    tm, tv, tiled = _select_blocks(
        n_rows, d_model, v_pad, x2.dtype.itemsize, x.dtype.itemsize, budget,
        row_block=row_block, v_block=v_block)
    assert v_pad % tv == 0, "vocab block must divide the padded vocab"

    n_pad = _round_up(n_rows, tm)
    if n_pad != n_rows:
        x2 = jnp.pad(x2, ((0, n_pad - n_rows), (0, 0)))

    compiler_params = pltpu.CompilerParams(
        dimension_semantics=(("parallel", "arbitrary", "arbitrary") if tiled
                             else ("parallel",)),
        vmem_limit_bytes=min(int(cap * 0.75), 96 * 1024 * 1024),
    )
    out_shape = jax.ShapeDtypeStruct((n_pad, v_pad), x.dtype)

    if not tiled:
        out = pl.pallas_call(
            _linear_logsoftmax_kernel,
            out_shape=out_shape,
            grid_spec=pltpu.PrefetchScalarGridSpec(
                num_scalar_prefetch=0,
                grid=(n_pad // tm,),
                in_specs=[
                    pl.BlockSpec((tm, d_model), lambda i: (i, 0)),      # x rows
                    pl.BlockSpec((d_model, v_pad), lambda i: (0, 0)),   # W^T (resident)
                    pl.BlockSpec((1, v_pad), lambda i: (0, 0)),         # bias (resident)
                ],
                out_specs=pl.BlockSpec((tm, v_pad), lambda i: (i, 0)),
            ),
            compiler_params=compiler_params,
        )(x2, w_t, b2)
    else:
        out = pl.pallas_call(
            _linear_logsoftmax_vtiled_kernel,
            out_shape=out_shape,
            grid_spec=pltpu.PrefetchScalarGridSpec(
                num_scalar_prefetch=0,
                grid=(n_pad // tm, 2, v_pad // tv),
                in_specs=[
                    pl.BlockSpec((tm, d_model), lambda i, p, v: (i, 0)),
                    pl.BlockSpec((d_model, tv), lambda i, p, v: (0, v)),
                    pl.BlockSpec((1, tv), lambda i, p, v: (0, v)),
                ],
                out_specs=pl.BlockSpec((tm, tv), lambda i, p, v: (i, v)),
                scratch_shapes=[pltpu.VMEM((tm, 1), jnp.float32),   # running max
                                pltpu.VMEM((tm, 1), jnp.float32)],  # running sum-exp
            ),
            compiler_params=compiler_params,
        )(x2, w_t, b2)

    out = out[:n_rows, :vocab]
    return out.reshape(*lead, vocab)


# ---------------------------------------------------------------------------
# Demo / correctness check
# ---------------------------------------------------------------------------
if __name__ == "__main__":
    d_model, vocab_size = 32, 128
    batch, seq = 2, 8

    key = jax.random.PRNGKey(0)
    kx, kw, kb = jax.random.split(key, 3)
    x = jax.random.normal(kx, (batch, seq, d_model), dtype=jnp.float32)
    # nn.Linear-style parameters: weight (vocabSize, dModel), bias (vocabSize,)
    weight = jax.random.normal(kw, (vocab_size, d_model), dtype=jnp.float32) * 0.1
    bias = jax.random.normal(kb, (vocab_size,), dtype=jnp.float32) * 0.1

    params = init_linear_params(weight, bias)        # one-time prep (transpose/bf16/pad)
    out = jax.block_until_ready(linear_log_softmax(x, params))
    assert out.shape == (batch, seq, vocab_size)

    # Reference with the same bf16 MXU operands (tight tolerance).
    logits_ref = jnp.dot(x.reshape(-1, d_model).astype(jnp.bfloat16),
                         params[0][:, :vocab_size],
                         preferred_element_type=jnp.float32) + bias[None, :]
    ref = jax.nn.log_softmax(logits_ref, axis=-1).reshape(batch, seq, vocab_size)
    assert jnp.allclose(out, ref, atol=1e-4, rtol=1e-4), "mismatch vs bf16 reference"

    # Full-precision module reference (loose tolerance: bf16 MXU operands).
    ref_f32 = jax.nn.log_softmax(
        jnp.einsum("bsd,vd->bsv", x, weight) + bias[None, None, :], axis=-1)
    assert jnp.allclose(out, ref_f32, atol=3e-2, rtol=3e-2), "mismatch vs f32 reference"

    # Also exercise the vocab-tiled two-pass path (auto-selected for large vocabs).
    vocab2 = 256
    kw2, kb2 = jax.random.split(kb)
    weight2 = jax.random.normal(kw2, (vocab2, d_model), dtype=jnp.float32) * 0.1
    bias2 = jax.random.normal(kb2, (vocab2,), dtype=jnp.float32) * 0.1
    params2 = init_linear_params(weight2, bias2)
    out2 = jax.block_until_ready(
        linear_log_softmax(x, params2, row_block=8, v_block=128))
    logits2 = jnp.dot(x.reshape(-1, d_model).astype(jnp.bfloat16),
                      params2[0][:, :vocab2],
                      preferred_element_type=jnp.float32) + bias2[None, :]
    ref2 = jax.nn.log_softmax(logits2, axis=-1).reshape(batch, seq, vocab2)
    assert jnp.allclose(out2, ref2, atol=1e-4, rtol=1e-4), "mismatch (vocab-tiled path)"

    print("KERNEL_OK")
</pallas_src>

<mosaic_0001>
module attributes {stable_mosaic.version = 11 : i64} {
  func.func @_linear_logsoftmax_kernel(%arg0: i32, %arg1: memref<8x32xf32, #tpu.memory_space<vmem>>, %arg2: memref<32x128xbf16, #tpu.memory_space<vmem>>, %arg3: memref<1x128xf32, #tpu.memory_space<vmem>>, %arg4: memref<8x128xf32, #tpu.memory_space<vmem>>) attributes {dimension_semantics = [#tpu.dimension_semantics<parallel>], iteration_bounds = array<i64: 2>, scalar_prefetch = 0 : i64, scratch_operands = 0 : i64, tpu.core_type = #tpu.core_type<tc>, window_params = [{transform_indices = @transform_0, window_bounds = array<i64: 8, 32>}, {pipeline_mode = #tpu.pipeline_mode<synchronous>, transform_indices = @transform_1, window_bounds = array<i64: 32, 128>}, {pipeline_mode = #tpu.pipeline_mode<synchronous>, transform_indices = @transform_2, window_bounds = array<i64: 1, 128>}, {transform_indices = @transform_3, window_bounds = array<i64: 8, 128>}]} {
    %c0 = arith.constant 0 : index
    %c0_0 = arith.constant 0 : index
    %0 = vector.load %arg1[%c0, %c0_0] : memref<8x32xf32, #tpu.memory_space<vmem>>, vector<8x32xf32>
    %1 = arith.truncf %0 : vector<8x32xf32> to vector<8x32xbf16>
    %c0_1 = arith.constant 0 : index
    %c0_2 = arith.constant 0 : index
    %2 = vector.load %arg2[%c0_1, %c0_2] : memref<32x128xbf16, #tpu.memory_space<vmem>>, vector<32x128xbf16>
    %cst = arith.constant dense<0.000000e+00> : vector<8x128xf32>
    %3 = tpu.matmul %1, %2, %cst {dimension_numbers = #tpu.dot_dimension_numbers<[1], [0], [0], [1], [0, 0, 1, 1], [], []>} : vector<8x32xbf16>, vector<32x128xbf16>, vector<8x128xf32> -> vector<8x128xf32>
    %c0_3 = arith.constant 0 : index
    %c0_4 = arith.constant 0 : index
    %4 = vector.load %arg3[%c0_3, %c0_4] : memref<1x128xf32, #tpu.memory_space<vmem>>, vector<1x128xf32>
    %5 = vector.broadcast %4 : vector<1x128xf32> to vector<8x128xf32>
    %6 = arith.addf %3, %5 : vector<8x128xf32>
    %cst_5 = arith.constant dense<0xFF800000> : vector<8xf32>
    %7 = vector.multi_reduction <maximumf>, %6, %cst_5 [1] : vector<8x128xf32> to vector<8xf32>
    %8 = vector.shape_cast %7 : vector<8xf32> to vector<8x1xf32>
    %9 = vector.broadcast %8 : vector<8x1xf32> to vector<8x128xf32>
    %10 = arith.subf %6, %9 : vector<8x128xf32>
    %11 = math.exp %10 : vector<8x128xf32>
    %cst_6 = arith.constant dense<0.000000e+00> : vector<8xf32>
    %12 = vector.multi_reduction <add>, %11, %cst_6 [1] : vector<8x128xf32> to vector<8xf32>
    %13 = vector.shape_cast %12 : vector<8xf32> to vector<8x1xf32>
    %14 = math.log %13 : vector<8x1xf32>
    %15 = vector.broadcast %14 : vector<8x1xf32> to vector<8x128xf32>
    %16 = arith.subf %10, %15 : vector<8x128xf32>
    %c0_7 = arith.constant 0 : index
    %c0_8 = arith.constant 0 : index
    %17 = vector.load %arg4[%c0_7, %c0_8] : memref<8x128xf32, #tpu.memory_space<vmem>>, vector<8x128xf32>
    tpu.vector_store %arg4[%c0_7, %c0_8], %16 {strides = array<i32>} : memref<8x128xf32, #tpu.memory_space<vmem>>, vector<8x128xf32>,
    return
  }
  func.func @transform_0(%arg0: i32) -> (i32, i32) {
    %c0_i32 = arith.constant 0 : i32
    %c0_i32_0 = arith.constant 0 : i32
    return %arg0, %c0_i32 : i32, i32
  }
  func.func @transform_1(%arg0: i32) -> (i32, i32) {
    %c0_i32 = arith.constant 0 : i32
    %c0_i32_0 = arith.constant 0 : i32
    %c0_i32_1 = arith.constant 0 : i32
    return %c0_i32, %c0_i32_0 : i32, i32
  }
  func.func @transform_2(%arg0: i32) -> (i32, i32) {
    %c0_i32 = arith.constant 0 : i32
    %c0_i32_0 = arith.constant 0 : i32
    %c0_i32_1 = arith.constant 0 : i32
    return %c0_i32, %c0_i32_0 : i32, i32
  }
  func.func @transform_3(%arg0: i32) -> (i32, i32) {
    %c0_i32 = arith.constant 0 : i32
    %c0_i32_0 = arith.constant 0 : i32
    return %arg0, %c0_i32 : i32, i32
  }
}

</mosaic_0001>

<llo_original>
// kernel: tpu_custom_call.1
$region0: #{tpu_custom_call.1}
  #allocation0 [shape = 'u32[]', space=smem, size = 0x4, offset = 0x4, fixed_abs, tag = 'smem constant byte address 0x4 - core index']
  #allocation1 [shape = 'u32[144,128]{1,0:T(1,128)}', space=vmem, size = 0x12000, scoped, tag = 'internal scratch']
  %s0 = inlined_call_operand.hbm [shape: f32[16,32], index: 0, kind: input, shape index: {}]
  %s1 = inlined_call_operand.hbm [shape: bf16[32,128], index: 1, kind: input, shape index: {}]
  %s2 = inlined_call_operand.vmem [shape: f32[1,128], index: 2, kind: input, shape index: {}]
  %s3 = inlined_call_operand.hbm [shape: f32[16,128], index: 3, kind: output, shape index: {}]
  %s4 = sld [smem:[#allocation0]]
  $region53: #{tpu_custom_call.1} parent=0
    _
  %s6 = ssub.s32 1, %s4
  %s7 = scalar_select 0, %s6, %s4
  $region1: #{tpu_custom_call.1} parent=0
    #allocation2 [shape = 'u8[8192]{0}', space=vmem, size = 0x2000, scoped, tag = 'input window, operand 0']
    #allocation3 [shape = 's32[2]{0}', space=sflag, size = 0x8, scoped, tag = 'scoped memory for tpu_custom_call.1']
    #allocation4 [shape = 's32[2]{0}', space=sflag, size = 0x8, scoped, tag = 'scoped memory for tpu_custom_call.1']
    #allocation5 [shape = 'u8[8192]{0}', space=vmem, size = 0x2000, scoped, tag = 'input window, operand 1, single buffered']
    #allocation6 [shape = 's32[1]{0}', space=sflag, size = 0x4, scoped, tag = 'scoped memory for tpu_custom_call.1']
    #allocation7 [shape = 'u8[8192]{0}', space=vmem, size = 0x2000, scoped, tag = 'output window, operand 0']
    %8 = vsyncpa [#allocation3], 0
    %s9 = scalar_lea.sflag [#allocation3], 1
    %10 = vsyncpa %s9, 0
    %11 = vsyncpa [#allocation6], 0
    %12 = vsyncpa [#allocation4], 0
    %s13 = scalar_lea.sflag [#allocation4], 1
    %14 = vsyncpa %s13, 0
    loop: start=0, step=1, limit=4
    $region2: #{tpu_custom_call.1} parent=1 // loop_pre_header
      _
    $region3: #{tpu_custom_call.1} parent=1 // loop_header
      %s16 = sphi 0, %s20
      %p17 = scmp.ge.s32.totalorder %s16, 4
      %s26 = sphi 0, %s28
      %s29 = sphi 0, %s26
      %s30 = sphi 0, %s29
      %s46 = sphi 0, %s30
      %s50 = sphi 0, %s50
      %s52 = sphi 0, %s50
      %s53 = sphi 0, %s52
      %s67 = sphi 0, %s53
      %s71 = sphi 0, %s71
      %s73 = sphi 0, %s71
      %s74 = sphi 0, %s73
      %s88 = sphi 0, %s74
      %s94 = sphi 0, %s96
      %s97 = sphi 0, %s94
      %s98 = sphi 0, %s97
      %s114 = sphi 0, %s98
    $region4: #{tpu_custom_call.1} parent=1 // loop_header_branch
      %19 = sbr.rel (%p17) target = $region8
    $region5: #{tpu_custom_call.1} parent=1 // loop_body
      %s21 = ssub.s32 %s16, 1
      %s22 = ssub.s32 %s16, 2
      %s23 = sadd.s32 %s16, 1
      %s24 = ssub.s32 %s16, %s23
      %p25 = scmp.eq.s32.totalorder %s24, 0
      %s27 = sadd.s32 %s26, 1
      %s28 = scalar_select %p25, %s26, %s27
      %p31 = pneg %p25
      %p32 = scmp.eq.s32.totalorder %s16, 1
      %p33 = por %p31, %p32
      %p34 = scmp.ne.s32.totalorder %s26, %s29
      %p35 = scmp.eq.s32.totalorder %s16, 0
      %p36 = por %p34, %p35
      %p37 = scmp.ne.s32.totalorder %s26, %s29
      %p38 = scmp.eq.s32.totalorder %s21, 1
      %p39 = por %p37, %p38
      %p40 = scmp.ne.s32.totalorder %s29, %s30
      %p41 = scmp.eq.s32.totalorder %s21, 0
      %p42 = por %p40, %p41
      %p43 = scmp.ne.s32.totalorder %s29, %s30
      %p44 = scmp.eq.s32.totalorder %s22, 1
      %p45 = por %p43, %p44
      %p47 = scmp.ne.s32.totalorder %s30, %s46
      %p48 = scmp.eq.s32.totalorder %s22, 0
      %p49 = por %p47, %p48
      %s51 = sadd.s32 %s50, 1
      %p54 = scmp.eq.s32.totalorder %s16, 1
      %p55 = scmp.ne.s32.totalorder %s50, %s52
      %p56 = scmp.eq.s32.totalorder %s16, 0
      %p57 = por %p55, %p56
      %p58 = scmp.ne.s32.totalorder %s50, %s52
      %p59 = scmp.eq.s32.totalorder %s21, 1
      %p60 = por %p58, %p59
      %p61 = scmp.ne.s32.totalorder %s52, %s53
      %p62 = scmp.eq.s32.totalorder %s21, 0
      %p63 = por %p61, %p62
      %p64 = scmp.ne.s32.totalorder %s52, %s53
      %p65 = scmp.eq.s32.totalorder %s22, 1
      %p66 = por %p64, %p65
      %p68 = scmp.ne.s32.totalorder %s53, %s67
      %p69 = scmp.eq.s32.totalorder %s22, 0
      %p70 = por %p68, %p69
      %s72 = sadd.s32 %s71, 1
      %p75 = scmp.eq.s32.totalorder %s16, 1
      %p76 = scmp.ne.s32.totalorder %s71, %s73
      %p77 = scmp.eq.s32.totalorder %s16, 0
      %p78 = por %p76, %p77
      %p79 = scmp.ne.s32.totalorder %s71, %s73
      %p80 = scmp.eq.s32.totalorder %s21, 1
      %p81 = por %p79, %p80
      %p82 = scmp.ne.s32.totalorder %s73, %s74
      %p83 = scmp.eq.s32.totalorder %s21, 0
      %p84 = por %p82, %p83
      %p85 = scmp.ne.s32.totalorder %s73, %s74
      %p86 = scmp.eq.s32.totalorder %s22, 1
      %p87 = por %p85, %p86
      %p89 = scmp.ne.s32.totalorder %s74, %s88
      %p90 = scmp.eq.s32.totalorder %s22, 0
      %p91 = por %p89, %p90
      %s92 = ssub.s32 %s16, %s23
      %p93 = scmp.eq.s32.totalorder %s92, 0
      %s95 = sadd.s32 %s94, 1
      %s96 = scalar_select %p93, %s94, %s95
      %p99 = pneg %p93
      %p100 = scmp.eq.s32.totalorder %s16, 1
      %p101 = por %p99, %p100
      %p102 = scmp.ne.s32.totalorder %s94, %s97
      %p103 = scmp.eq.s32.totalorder %s16, 0
      %p104 = por %p102, %p103
      %p105 = scmp.ne.s32.totalorder %s94, %s97
      %p106 = scmp.eq.s32.totalorder %s21, 1
      %p107 = por %p105, %p106
      %p108 = scmp.ne.s32.totalorder %s97, %s98
      %p109 = scmp.eq.s32.totalorder %s21, 0
      %p110 = por %p108, %p109
      %p111 = scmp.ne.s32.totalorder %s97, %s98
      %p112 = scmp.eq.s32.totalorder %s22, 1
      %p113 = por %p111, %p112
      %p115 = scmp.ne.s32.totalorder %s98, %s114
      %p116 = scmp.eq.s32.totalorder %s22, 0
      %p117 = por %p115, %p116
      %p118 = scmp.le.s32.totalorder 1, %s16
      %p119 = scmp.lt.s32.totalorder %s16, 3
      %p120 = pnand %p118, %p119
      %p121 = pneg %p120
      // Predicated region
      $region9: #{tpu_custom_call.1} parent=5 // pred_check
        _
      $region10: #{tpu_custom_call.1} parent=5 // pred_check_branch
        %123 = sbr.rel (%p120) target = $region12
      $region11: #{tpu_custom_call.1} parent=5 // pred_region
        %s124 = ssub.s32 %s16, 1
        // Predicated region
        $region13: #{tpu_custom_call.1} parent=11 // pred_check
          %p125 = pneg %p63
        $region14: #{tpu_custom_call.1} parent=11 // pred_check_branch
          %127 = sbr.rel (%p125) target = $region16
        $region15: #{tpu_custom_call.1} parent=11 // pred_region
          %s129 = ssub.s32 256, 256
          %130 = vsyncadd [#allocation6], %s129
          %s131 = sshll.u32 [#allocation5], 4
          %s132 = int_to_ptr.vmem [resolvable:$true] %s131
          %137 = dma.hbm_to_vmem [thread:$0]  %s1, 256, %s132, [#allocation6], 64, 64, 4
        $region16: #{tpu_custom_call.1} parent=11 // pred_fallthru
          _
        // Predicated region
        $region17: #{tpu_custom_call.1} parent=11 // pred_check
          %p138 = pneg %p84
        $region18: #{tpu_custom_call.1} parent=11 // pred_check_branch
          %140 = sbr.rel (%p138) target = $region20
        $region19: #{tpu_custom_call.1} parent=11 // pred_region
          _
        $region20: #{tpu_custom_call.1} parent=11 // pred_fallthru
          _
      $region12: #{tpu_custom_call.1} parent=5 // pred_fallthru
        _
      %p141 = scmp.lt.s32.totalorder %s16, 2
      // Predicated region
      $region21: #{tpu_custom_call.1} parent=5 // pred_check
        %p142 = pneg %p141
      $region22: #{tpu_custom_call.1} parent=5 // pred_check_branch
        %144 = sbr.rel (%p142) target = $region24
      $region23: #{tpu_custom_call.1} parent=5 // pred_region
        // Predicated region
        $region25: #{tpu_custom_call.1} parent=23 // pred_check
          %p145 = pneg %p36
        $region26: #{tpu_custom_call.1} parent=23 // pred_check_branch
          %147 = sbr.rel (%p145) target = $region28
        $region27: #{tpu_custom_call.1} parent=23 // pred_region
          %s148 = sand.u32 %s26, 1
          %s149 = scalar_lea.sflag [#allocation3], %s148
          %s150 = sand.u32 %s26, 1
          %s151 = smul.addr %s150, 8
          %s152 = scalar_lea.vmem [#allocation2], %s151
          %s154 = ssub.s32 128, 128
          %155 = vsyncadd %s149, %s154
          %s156 = smul.addr %s16, 128
          %s157 = scalar_lea.hbm %s0, %s156
          %s159 = sshll.u32 %s152, 4
          %s160 = int_to_ptr.vmem [resolvable:$true] %s159
          %162 = dma.hbm_to_vmem [thread:$0]  %s157, 128, %s160, %s149
        $region28: #{tpu_custom_call.1} parent=23 // pred_fallthru
          _
      $region24: #{tpu_custom_call.1} parent=5 // pred_fallthru
        _
      %p163 = scmp.le.s32.totalorder 1, %s16
      %p164 = scmp.lt.s32.totalorder %s16, 3
      %p165 = pnand %p163, %p164
      %p166 = pneg %p165
      // Predicated region
      $region29: #{tpu_custom_call.1} parent=5 // pred_check
        _
      $region30: #{tpu_custom_call.1} parent=5 // pred_check_branch
        %168 = sbr.rel (%p165) target = $region32
      $region31: #{tpu_custom_call.1} parent=5 // pred_region
        %s169 = ssub.s32 %s16, 1
        %s170 = sand.u32 %s29, 1
        %s171 = scalar_lea.sflag [#allocation3], %s170
        %s172 = sand.u32 %s29, 1
        %s173 = smul.addr %s172, 8
        %s174 = scalar_lea.vmem [#allocation2], %s173
        // Predicated region
        $region33: #{tpu_custom_call.1} parent=31 // pred_check
          %p175 = pneg %p42
        $region34: #{tpu_custom_call.1} parent=31 // pred_check_branch
          %177 = sbr.rel (%p175) target = $region36
        $region35: #{tpu_custom_call.1} parent=31 // pred_region
          %178 = dma.done %s171, 128
        $region36: #{tpu_custom_call.1} parent=31 // pred_fallthru
          _
        // Predicated region
        $region37: #{tpu_custom_call.1} parent=31 // pred_check
          %p179 = pneg %p63
        $region38: #{tpu_custom_call.1} parent=31 // pred_check_branch
          %181 = sbr.rel (%p179) target = $region40
        $region39: #{tpu_custom_call.1} parent=31 // pred_region
          %182 = dma.done [#allocation6], 256
        $region40: #{tpu_custom_call.1} parent=31 // pred_fallthru
          _
        %s183 = sand.u32 %s29, 1
        %s184 = scalar_lea.sflag [#allocation3], %s183
        %s185 = sand.u32 %s29, 1
        %s186 = smul.addr %s185, 8
        %s187 = scalar_lea.vmem [#allocation2], %s186
        %p188 = pneg %p42
        %p189 = pneg %p39
        %p190 = pneg %p63
        %p191 = pneg %p60
        %p192 = pneg %p84
        %p193 = pneg %p81
        %p194 = pneg %p110
        %p195 = pneg %p107
        %s196 = sand.u32 %s97, 1
        %s197 = scalar_lea.sflag [#allocation4], %s196
        %s198 = sand.u32 %s97, 1
        %s199 = smul.addr %s198, 8
        %s200 = scalar_lea.vmem [#allocation7], %s199
        %v202 = vld [vmem:[%s174] sm:$0xff]
        %v203 = vpack.c.bf16 %v202, %v202
        %v204 = vld [vmem:[#allocation5] sm:$0xf]
        %v205 = vld [vmem:[#allocation5 + $0x4] sm:$0xf]
        %v206 = vld [vmem:[#allocation5 + $0x8] sm:$0xf]
        %v207 = vld [vmem:[#allocation5 + $0xc] sm:$0xf]
        %v208 = vld [vmem:[%s2] sm:$0x1]
        %v210 = vlaneseq
        %v211 = vshrl.u32 %v210, 7
        %v212 = vsub.s32 0, %v211
        %v213 = vrot.slane %v208, %v212
        %v219 = vunpack.c.l.b16 %v204
        %v220 = vunpack.c.l.b16 %v205
        %v221 = vunpack.c.l.b16 %v206
        %v222 = vunpack.c.l.b16 %v207
        %v223 = vpack.c.b16 %v220, %v219
        %v224 = vpack.c.b16 %v222, %v221
        %vm227 = vcmask 261120
        %v229 = vsel %vm227, %v203, 0
        %231 = vmatprep.subr.bf16.mxu0 0
        %232 = vmatpush1.bf16.msra.mxu0 %v223
        %233 = vmatprep.subr.bf16.mxu0 0
        %234 = vmatpush1.bf16.msra.mxu0 %v224
        %235 = vmatprep.subr.bf16.mxu0 0
        %236 = vmatpush1.bf16.msra.mxu0 0
        %237 = vmatprep.subr.bf16.mxu0 0
        %238 = vmatpush1.bf16.msra.mxu0 0
        %239 = vmatprep.subr.bf16.mxu0 0
        %240 = vmatpush1.bf16.msra.mxu0 0
        %241 = vmatprep.subr.bf16.mxu0 0
        %242 = vmatpush1.bf16.msra.mxu0 0
        %243 = vmatprep.subr.bf16.mxu0 0
        %244 = vmatpush1.bf16.msra.mxu0 0
        %245 = vmatprep.subr.bf16.mxu0 0
        %246 = vmatpush1.bf16.msra.mxu0 0
        %247 = vmatprep.subr.bf16.mxu0 0
        %248 = vmatpush1.bf16.msra.mxu0 0
        %249 = vmatprep.subr.bf16.mxu0 0
        %250 = vmatpush1.bf16.msra.mxu0 0
        %251 = vmatprep.subr.bf16.mxu0 0
        %252 = vmatpush1.bf16.msra.mxu0 0
        %253 = vmatprep.subr.bf16.mxu0 0
        %254 = vmatpush1.bf16.msra.mxu0 0
        %255 = vmatprep.subr.bf16.mxu0 0
        %256 = vmatpush1.bf16.msra.mxu0 0
        %257 = vmatprep.subr.bf16.mxu0 0
        %258 = vmatpush1.bf16.msra.mxu0 0
        %259 = vmatprep.subr.bf16.mxu0 0
        %260 = vmatpush1.bf16.msra.mxu0 0
        %261 = vmatprep.subr.bf16.mxu0 0
        %262 = vmatpush1.bf16.msra.mxu0 0
        %263 = vmatprep.mubr.bf16.mxu0 0
        %264 = vmatmul.mubr.bf16.gmra.mrb[0].mxu0 %v229
        %v265 = vpop.f32.mrb[0].mxu0
        %v266 = vadd.f32 %v213, %v265
        %v267 = vpop.f32.mrb[0].mxu0
        %v268 = vpop.f32.mrb[0].mxu0
        %v269 = vpop.f32.mrb[0].mxu0
        %270 = vdwg.mxu0
        %271 = vmax.xlane.f32.xlu0 %v266
        %v272 = vpop.xlane.xlu0 %271
        %v273 = vsub.f32 %v266, %v272
        %v274 = vmul.f32 %v273, 1.442695
        %v275 = vpow.pop %v274
        %276 = vadd.xlane.f32.xlu0 %v275
        %v277 = vpop.xlane.xlu0 %276
        %v278 = vlog2.pop %v277
        %v279 = vmul.f32 %v278, 0.6931472
        %v280 = vsub.f32 %v273, %v279
        %281 = vst [vmem:[%s200] sm:$0xff] %v280
        %s282 = sand.u32 %s97, 1
        %s283 = scalar_lea.sflag [#allocation4], %s282
        %s284 = sand.u32 %s97, 1
        %s285 = smul.addr %s284, 8
        %s286 = scalar_lea.vmem [#allocation7], %s285
        // Predicated region
        $region41: #{tpu_custom_call.1} parent=31 // pred_check
          %p287 = pneg %p107
        $region42: #{tpu_custom_call.1} parent=31 // pred_check_branch
          %289 = sbr.rel (%p287) target = $region44
        $region43: #{tpu_custom_call.1} parent=31 // pred_region
          %s291 = ssub.s32 128, 128
          %292 = vsyncadd %s283, %s291
          %s293 = smul.addr %s21, 128
          %s294 = scalar_lea.hbm %s3, %s293
          %s296 = sshll.u32 %s286, 4
          %s297 = int_to_ptr.vmem [resolvable:$true] %s296
          %299 = dma.vmem_to_hbm [thread:$0]  %s297, 128, %s294, %s283
        $region44: #{tpu_custom_call.1} parent=31 // pred_fallthru
          _
      $region32: #{tpu_custom_call.1} parent=5 // pred_fallthru
        _
      %p300 = scmp.le.s32.totalorder 2, %s16
      // Predicated region
      $region45: #{tpu_custom_call.1} parent=5 // pred_check
        %p301 = pneg %p300
      $region46: #{tpu_custom_call.1} parent=5 // pred_check_branch
        %303 = sbr.rel (%p301) target = $region48
      $region47: #{tpu_custom_call.1} parent=5 // pred_region
        %s304 = ssub.s32 %s16, 2
        // Predicated region
        $region49: #{tpu_custom_call.1} parent=47 // pred_check
          %p305 = pneg %p113
        $region50: #{tpu_custom_call.1} parent=47 // pred_check_branch
          %307 = sbr.rel (%p305) target = $region52
        $region51: #{tpu_custom_call.1} parent=47 // pred_region
          %s308 = sand.u32 %s98, 1
          %s309 = scalar_lea.sflag [#allocation4], %s308
          %s310 = sand.u32 %s98, 1
          %s311 = smul.addr %s310, 8
          %s312 = scalar_lea.vmem [#allocation7], %s311
          %313 = dma.done %s309, 128
        $region52: #{tpu_custom_call.1} parent=47 // pred_fallthru
          _
      $region48: #{tpu_custom_call.1} parent=5 // pred_fallthru
        _
    $region6: #{tpu_custom_call.1} parent=1 // loop_footer
      %s20 = sadd.s32 1, %s16
    $region7: #{tpu_custom_call.1} parent=1 // loop_footer_branch
      %15 = sbr.rel target = $region3
    $region8: #{tpu_custom_call.1} parent=1 // loop_exit
      _
    %314 = vsyncpa [#allocation3], 1
    %s315 = scalar_lea.sflag [#allocation3], 1
    %316 = vsyncpa %s315, 1
    %317 = vsyncpa [#allocation6], 1
    %318 = vsyncpa [#allocation4], 1
    %s319 = scalar_lea.sflag [#allocation4], 1
    %320 = vsyncpa %s319, 1

</llo_original>
